<compile_context>
chip_gen: v5e
topology: v5e:2x2
jax: 0.10.0
libtpu: 0.0.40
codegen_flags: <defaults>
</compile_context>

<pallas_src>
import jax
import jax.numpy as jnp
from jax import lax
from jax.experimental import pallas as pl
from jax.experimental.pallas import tpu as pltpu


def _cdiv(a: int, b: int) -> int:
    return (a + b - 1) // b


def _round_up(a: int, b: int) -> int:
    return _cdiv(a, b) * b


# ---------------------------------------------------------------------------
# Kernels
# ---------------------------------------------------------------------------

def _patch_embed_kernel(x_ref, w_ref, b_ref, o_ref):
    # x_ref: (tm, Kd), w_ref: (Kd, N_pad), b_ref: (1, N_pad), o_ref: (tm, N_pad)
    acc = jnp.dot(x_ref[...], w_ref[...], preferred_element_type=jnp.float32)
    o_ref[...] = (acc + b_ref[...]).astype(o_ref.dtype)


def _patch_embed_kernel_mc(x_ref, w_ref, b_ref, o_ref, acc_ref):
    # Multi-channel path: accumulate over the trailing ("arbitrary") channel grid axis.
    # x_ref: (1, 1, tp, P), w_ref: (1, P, N_pad), b_ref: (1, N_pad),
    # o_ref: (1, tp, N_pad), acc_ref: (tp, N_pad) f32 scratch.
    c = pl.program_id(2)

    @pl.when(c == 0)
    def _():
        acc_ref[...] = jnp.zeros_like(acc_ref)

    acc_ref[...] += jnp.dot(x_ref[0, 0], w_ref[0], preferred_element_type=jnp.float32)

    @pl.when(c == pl.num_programs(2) - 1)
    def _():
        o_ref[0] = (acc_ref[...] + b_ref[...]).astype(o_ref.dtype)


# ---------------------------------------------------------------------------
# Tile sizing (accurate VMEM accounting, lane padding included)
# ---------------------------------------------------------------------------

def _choose_tm(M, Kd, N_pad, in_bytes, w_bytes, out_bytes,
               budget_bytes=24 * 1024 * 1024):
    """Largest row tile (multiple of 8, cap 1024) fitting a conservative VMEM budget.

    Counts the lane padding of the (tm, Kd) LHS tile (Kd < 128 still occupies 128 lanes per
    sublane in VMEM) and the real output dtype.  The resident (Kd, N_pad) weight / (1, N_pad)
    bias are counted double-buffered; they are tiny after the host-side transpose, so we keep
    default pipelining instead of pl.Buffered(1).  ~24 MiB keeps the working set inside v7x's
    32 MiB scoped VMEM with headroom (v5e/v6e have far more physical VMEM).
    """
    kd_lanes = _round_up(Kd, 128)
    per_row = 2 * (kd_lanes * in_bytes + N_pad * out_bytes)        # LHS + OUT streams (2-buf)
    fixed = 2 * (_round_up(Kd, 8) * N_pad + 8 * N_pad) * w_bytes   # weight + bias (2-buf)
    avail = max(budget_bytes - fixed, 8 * per_row)
    tm = max(8, min(1024, (avail // per_row) // 8 * 8))
    g = _cdiv(M, tm)
    if g == 1 and M > 8:
        # Split so the "parallel" grid axis can shard across both v7x TensorCores.
        tm = min(tm, _round_up(_cdiv(M, 2), 8))
    elif g > 2 and g % 2 == 1:
        # Prefer an even grid length (balanced across 2 TCs) when the tile stays large.
        tm_even = _round_up(_cdiv(M, g + 1), 8)
        if tm_even >= max(256, tm // 2):
            tm = tm_even
    return tm


def _choose_tp(num_patches, P, N_pad, in_bytes, w_bytes, out_bytes,
               budget_bytes=24 * 1024 * 1024):
    """Patch-row tile for the multi-channel path (per-batch, per-channel tiles)."""
    if num_patches <= 8:
        return num_patches                       # full dim -> always a legal block shape
    p_lanes = _round_up(P, 128)
    per_row = (2 * p_lanes * in_bytes            # LHS stream (2-buf)
               + 2 * N_pad * out_bytes           # OUT stream (2-buf)
               + N_pad * 4)                      # f32 accumulator scratch (1-buf)
    fixed = 2 * (_round_up(P, 8) * N_pad + 8 * N_pad) * w_bytes
    avail = max(budget_bytes - fixed, 8 * per_row)
    tp = max(8, min(1024, (avail // per_row) // 8 * 8))
    return min(tp, _round_up(num_patches, 8))


# ---------------------------------------------------------------------------
# Wrapper
# ---------------------------------------------------------------------------

def patch_embed_1d(x, conv_weight, conv_bias, patch_size, out_dtype=None):
    """Pallas implementation of PatchEmbed1D.forward.

    x:           (B, C, K)
    conv_weight: (embed_dim, C, patch_size)   (nn.Conv1d layout: out, in, kernel)
    conv_bias:   (embed_dim,)
    returns:     (B, K // patch_size, embed_dim)
    """
    B, C, K = x.shape
    E = conv_weight.shape[0]
    P = patch_size
    num_patches = K // P
    M = B * num_patches
    Kd = C * P
    if out_dtype is None:
        out_dtype = x.dtype   # pass bf16 here (with bf16 inputs) to halve every HBM stream

    in_bytes = jnp.dtype(x.dtype).itemsize
    w_bytes = jnp.dtype(conv_weight.dtype).itemsize
    out_bytes = jnp.dtype(out_dtype).itemsize

    # Lane-dense output: pad embed dim up to a multiple of 128 (no-op for 256/512/768/1024...).
    N_pad = _round_up(E, 128)

    # Weight -> (Kd, N_pad): lane dim = embed (dense), contraction along sublanes.  Done once
    # on a few-KiB tensor, so there is no per-step RHS relayout inside the kernel.
    w2 = jnp.transpose(conv_weight.reshape(E, Kd), (1, 0))
    bias = conv_bias
    if N_pad != E:
        w2 = jnp.pad(w2, ((0, 0), (0, N_pad - E)))
        bias = jnp.pad(bias, (0, N_pad - E))
    bias2d = bias.reshape(1, N_pad)

    cost = pl.CostEstimate(
        flops=2 * M * Kd * N_pad,
        transcendentals=0,
        bytes_accessed=(M * Kd * in_bytes + Kd * N_pad * w_bytes
                        + N_pad * w_bytes + M * N_pad * out_bytes),
    )
    cparams = dict(vmem_limit_bytes=32 * 1024 * 1024)

    if C == 1:
        # Patch extraction is a pure reshape; LHS streamed as (M, Kd) rows.
        lhs = x[:, 0, : num_patches * P].reshape(M, Kd)
        tm = _choose_tm(M, Kd, N_pad, in_bytes, w_bytes, out_bytes)
        grid = (_cdiv(M, tm),)                 # ragged last block masked by Pallas
        out = pl.pallas_call(
            _patch_embed_kernel,
            out_shape=jax.ShapeDtypeStruct((M, N_pad), out_dtype),
            grid_spec=pltpu.PrefetchScalarGridSpec(
                num_scalar_prefetch=0,
                grid=grid,
                in_specs=[
                    pl.BlockSpec((tm, Kd), lambda i: (i, 0)),      # patch rows (streamed)
                    pl.BlockSpec((Kd, N_pad), lambda i: (0, 0)),   # weight (resident, tiny)
                    pl.BlockSpec((1, N_pad), lambda i: (0, 0)),    # bias (resident)
                ],
                out_specs=pl.BlockSpec((tm, N_pad), lambda i: (i, 0)),
            ),
            compiler_params=pltpu.CompilerParams(
                dimension_semantics=("parallel",), **cparams),
            cost_estimate=cost,
        )(lhs, w2, bias2d)
        out = out.reshape(B, num_patches, N_pad)
    else:
        # Multi-channel: fold the channel contraction into the kernel (trailing "arbitrary"
        # grid axis over C with an f32 accumulator) so x is consumed in its natural (B, C, K)
        # layout -- no materialized HBM transpose of the input before the kernel.
        x4 = x[:, :, : num_patches * P].reshape(B, C, num_patches, P)
        w3 = w2.reshape(C, P, N_pad)
        tp = _choose_tp(num_patches, P, N_pad, in_bytes, w_bytes, out_bytes)
        grid = (B, _cdiv(num_patches, tp), C)
        out = pl.pallas_call(
            _patch_embed_kernel_mc,
            out_shape=jax.ShapeDtypeStruct((B, num_patches, N_pad), out_dtype),
            grid_spec=pltpu.PrefetchScalarGridSpec(
                num_scalar_prefetch=0,
                grid=grid,
                in_specs=[
                    pl.BlockSpec((1, 1, tp, P), lambda b, i, c: (b, c, i, 0)),
                    pl.BlockSpec((1, P, N_pad), lambda b, i, c: (c, 0, 0)),
                    pl.BlockSpec((1, N_pad), lambda b, i, c: (0, 0)),
                ],
                out_specs=pl.BlockSpec((1, tp, N_pad), lambda b, i, c: (b, i, 0)),
                scratch_shapes=[pltpu.VMEM((tp, N_pad), jnp.float32)],
            ),
            compiler_params=pltpu.CompilerParams(
                dimension_semantics=("parallel", "parallel", "arbitrary"), **cparams),
            cost_estimate=cost,
        )(x4, w3, bias2d)

    if N_pad != E:
        out = out[..., :E]   # only when embed_dim is not a multiple of 128
    return out.reshape(B, num_patches, E)


# ---------------------------------------------------------------------------
# Reference + tests
# ---------------------------------------------------------------------------

def _reference_conv1d(x, w, b, patch_size):
    """Independent reference using lax.conv_general_dilated (matches nn.Conv1d)."""
    y = lax.conv_general_dilated(
        x, w,
        window_strides=(patch_size,),
        padding="VALID",
        dimension_numbers=("NCH", "OIH", "NCH"),
    )
    y = y + b[None, :, None]
    return jnp.transpose(y, (0, 2, 1))


def _run_case(key, B, C, num_voxels, patch_size, embed_dim):
    kx, kw, kb = jax.random.split(key, 3)
    x = jax.random.normal(kx, (B, C, num_voxels), dtype=jnp.float32)
    conv_weight = jax.random.normal(kw, (embed_dim, C, patch_size), dtype=jnp.float32) * 0.02
    conv_bias = jax.random.normal(kb, (embed_dim,), dtype=jnp.float32) * 0.02

    out = patch_embed_1d(x, conv_weight, conv_bias, patch_size)
    out = jax.block_until_ready(out)

    ref = _reference_conv1d(x, conv_weight, conv_bias, patch_size)
    assert out.shape == (B, num_voxels // patch_size, embed_dim), out.shape
    assert jnp.allclose(out, ref, atol=1e-5, rtol=1e-5), "mismatch vs conv reference"


if __name__ == "__main__":
    key = jax.random.PRNGKey(0)
    k1, k2, k3 = jax.random.split(key, 3)

    # Small PatchEmbed1D-style config (in_chans=1, embed_dim not a multiple of 128).
    _run_case(k1, B=2, C=1, num_voxels=128, patch_size=16, embed_dim=32)
    # Multi-channel branch (exercises the in-kernel channel accumulation path).
    _run_case(k2, B=2, C=2, num_voxels=64, patch_size=16, embed_dim=48)
    # Module-default config (num_voxels=224, embed_dim=768): lane-dense, no post-slice.
    _run_case(k3, B=2, C=1, num_voxels=224, patch_size=16, embed_dim=768)

    print("KERNEL_OK")
</pallas_src>

<mosaic_0001>
module attributes {stable_mosaic.version = 11 : i64} {
  func.func @_patch_embed_kernel(%arg0: i32, %arg1: memref<8x16xf32, #tpu.memory_space<vmem>>, %arg2: memref<16x128xf32, #tpu.memory_space<vmem>>, %arg3: memref<1x128xf32, #tpu.memory_space<vmem>>, %arg4: memref<8x128xf32, #tpu.memory_space<vmem>>) attributes {dimension_semantics = [#tpu.dimension_semantics<parallel>], iteration_bounds = array<i64: 2>, scalar_prefetch = 0 : i64, scratch_operands = 0 : i64, tpu.core_type = #tpu.core_type<tc>, window_params = [{transform_indices = @transform_0, window_bounds = array<i64: 8, 16>}, {pipeline_mode = #tpu.pipeline_mode<synchronous>, transform_indices = @transform_1, window_bounds = array<i64: 16, 128>}, {pipeline_mode = #tpu.pipeline_mode<synchronous>, transform_indices = @transform_2, window_bounds = array<i64: 1, 128>}, {transform_indices = @transform_3, window_bounds = array<i64: 8, 128>}]} {
    %c0 = arith.constant 0 : index
    %c0_0 = arith.constant 0 : index
    %0 = vector.load %arg1[%c0, %c0_0] : memref<8x16xf32, #tpu.memory_space<vmem>>, vector<8x16xf32>
    %c0_1 = arith.constant 0 : index
    %c0_2 = arith.constant 0 : index
    %1 = vector.load %arg2[%c0_1, %c0_2] : memref<16x128xf32, #tpu.memory_space<vmem>>, vector<16x128xf32>
    %cst = arith.constant dense<0.000000e+00> : vector<8x128xf32>
    %2 = tpu.matmul %0, %1, %cst {dimension_numbers = #tpu.dot_dimension_numbers<[1], [0], [0], [1], [0, 0, 1, 1], [], []>} : vector<8x16xf32>, vector<16x128xf32>, vector<8x128xf32> -> vector<8x128xf32>
    %c0_3 = arith.constant 0 : index
    %c0_4 = arith.constant 0 : index
    %3 = vector.load %arg3[%c0_3, %c0_4] : memref<1x128xf32, #tpu.memory_space<vmem>>, vector<1x128xf32>
    %4 = vector.broadcast %3 : vector<1x128xf32> to vector<8x128xf32>
    %5 = arith.addf %2, %4 : vector<8x128xf32>
    %c0_5 = arith.constant 0 : index
    %c0_6 = arith.constant 0 : index
    %6 = vector.load %arg4[%c0_5, %c0_6] : memref<8x128xf32, #tpu.memory_space<vmem>>, vector<8x128xf32>
    tpu.vector_store %arg4[%c0_5, %c0_6], %5 {strides = array<i32>} : memref<8x128xf32, #tpu.memory_space<vmem>>, vector<8x128xf32>,
    return
  }
  func.func @transform_0(%arg0: i32) -> (i32, i32) {
    %c0_i32 = arith.constant 0 : i32
    %c0_i32_0 = arith.constant 0 : i32
    return %arg0, %c0_i32 : i32, i32
  }
  func.func @transform_1(%arg0: i32) -> (i32, i32) {
    %c0_i32 = arith.constant 0 : i32
    %c0_i32_0 = arith.constant 0 : i32
    %c0_i32_1 = arith.constant 0 : i32
    return %c0_i32, %c0_i32_0 : i32, i32
  }
  func.func @transform_2(%arg0: i32) -> (i32, i32) {
    %c0_i32 = arith.constant 0 : i32
    %c0_i32_0 = arith.constant 0 : i32
    %c0_i32_1 = arith.constant 0 : i32
    return %c0_i32, %c0_i32_0 : i32, i32
  }
  func.func @transform_3(%arg0: i32) -> (i32, i32) {
    %c0_i32 = arith.constant 0 : i32
    %c0_i32_0 = arith.constant 0 : i32
    return %arg0, %c0_i32 : i32, i32
  }
}

</mosaic_0001>

<llo_original>
// kernel: tpu_custom_call.1
$region0: #{tpu_custom_call.1}
  #allocation0 [shape = 'u32[]', space=smem, size = 0x4, offset = 0x4, fixed_abs, tag = 'smem constant byte address 0x4 - core index']
  #allocation1 [shape = 'u32[72,128]{1,0:T(1,128)}', space=vmem, size = 0x9000, scoped, tag = 'internal scratch']
  %s0 = inlined_call_operand.hbm [shape: f32[16,16], index: 0, kind: input, shape index: {}]
  %s1 = inlined_call_operand.hbm [shape: f32[16,128], index: 1, kind: input, shape index: {}]
  %s2 = inlined_call_operand.vmem [shape: f32[1,128], index: 2, kind: input, shape index: {}]
  %s3 = inlined_call_operand.hbm [shape: f32[16,128], index: 3, kind: output, shape index: {}]
  %s4 = sld [smem:[#allocation0]]
  $region53: #{tpu_custom_call.1} parent=0
    _
  %s6 = ssub.s32 1, %s4
  %s7 = scalar_select 0, %s6, %s4
  $region1: #{tpu_custom_call.1} parent=0
    #allocation2 [shape = 'u8[8192]{0}', space=vmem, size = 0x2000, scoped, tag = 'input window, operand 0']
    #allocation3 [shape = 's32[2]{0}', space=sflag, size = 0x8, scoped, tag = 'scoped memory for tpu_custom_call.1']
    #allocation4 [shape = 's32[2]{0}', space=sflag, size = 0x8, scoped, tag = 'scoped memory for tpu_custom_call.1']
    #allocation5 [shape = 'u8[8192]{0}', space=vmem, size = 0x2000, scoped, tag = 'input window, operand 1, single buffered']
    #allocation6 [shape = 's32[1]{0}', space=sflag, size = 0x4, scoped, tag = 'scoped memory for tpu_custom_call.1']
    #allocation7 [shape = 'u8[8192]{0}', space=vmem, size = 0x2000, scoped, tag = 'output window, operand 0']
    %8 = vsyncpa [#allocation3], 0
    %s9 = scalar_lea.sflag [#allocation3], 1
    %10 = vsyncpa %s9, 0
    %11 = vsyncpa [#allocation6], 0
    %12 = vsyncpa [#allocation4], 0
    %s13 = scalar_lea.sflag [#allocation4], 1
    %14 = vsyncpa %s13, 0
    loop: start=0, step=1, limit=4
    $region2: #{tpu_custom_call.1} parent=1 // loop_pre_header
      _
    $region3: #{tpu_custom_call.1} parent=1 // loop_header
      %s16 = sphi 0, %s20
      %p17 = scmp.ge.s32.totalorder %s16, 4
      %s26 = sphi 0, %s28
      %s29 = sphi 0, %s26
      %s30 = sphi 0, %s29
      %s46 = sphi 0, %s30
      %s50 = sphi 0, %s50
      %s52 = sphi 0, %s50
      %s53 = sphi 0, %s52
      %s67 = sphi 0, %s53
      %s71 = sphi 0, %s71
      %s73 = sphi 0, %s71
      %s74 = sphi 0, %s73
      %s88 = sphi 0, %s74
      %s94 = sphi 0, %s96
      %s97 = sphi 0, %s94
      %s98 = sphi 0, %s97
      %s114 = sphi 0, %s98
    $region4: #{tpu_custom_call.1} parent=1 // loop_header_branch
      %19 = sbr.rel (%p17) target = $region8
    $region5: #{tpu_custom_call.1} parent=1 // loop_body
      %s21 = ssub.s32 %s16, 1
      %s22 = ssub.s32 %s16, 2
      %s23 = sadd.s32 %s16, 1
      %s24 = ssub.s32 %s16, %s23
      %p25 = scmp.eq.s32.totalorder %s24, 0
      %s27 = sadd.s32 %s26, 1
      %s28 = scalar_select %p25, %s26, %s27
      %p31 = pneg %p25
      %p32 = scmp.eq.s32.totalorder %s16, 1
      %p33 = por %p31, %p32
      %p34 = scmp.ne.s32.totalorder %s26, %s29
      %p35 = scmp.eq.s32.totalorder %s16, 0
      %p36 = por %p34, %p35
      %p37 = scmp.ne.s32.totalorder %s26, %s29
      %p38 = scmp.eq.s32.totalorder %s21, 1
      %p39 = por %p37, %p38
      %p40 = scmp.ne.s32.totalorder %s29, %s30
      %p41 = scmp.eq.s32.totalorder %s21, 0
      %p42 = por %p40, %p41
      %p43 = scmp.ne.s32.totalorder %s29, %s30
      %p44 = scmp.eq.s32.totalorder %s22, 1
      %p45 = por %p43, %p44
      %p47 = scmp.ne.s32.totalorder %s30, %s46
      %p48 = scmp.eq.s32.totalorder %s22, 0
      %p49 = por %p47, %p48
      %s51 = sadd.s32 %s50, 1
      %p54 = scmp.eq.s32.totalorder %s16, 1
      %p55 = scmp.ne.s32.totalorder %s50, %s52
      %p56 = scmp.eq.s32.totalorder %s16, 0
      %p57 = por %p55, %p56
      %p58 = scmp.ne.s32.totalorder %s50, %s52
      %p59 = scmp.eq.s32.totalorder %s21, 1
      %p60 = por %p58, %p59
      %p61 = scmp.ne.s32.totalorder %s52, %s53
      %p62 = scmp.eq.s32.totalorder %s21, 0
      %p63 = por %p61, %p62
      %p64 = scmp.ne.s32.totalorder %s52, %s53
      %p65 = scmp.eq.s32.totalorder %s22, 1
      %p66 = por %p64, %p65
      %p68 = scmp.ne.s32.totalorder %s53, %s67
      %p69 = scmp.eq.s32.totalorder %s22, 0
      %p70 = por %p68, %p69
      %s72 = sadd.s32 %s71, 1
      %p75 = scmp.eq.s32.totalorder %s16, 1
      %p76 = scmp.ne.s32.totalorder %s71, %s73
      %p77 = scmp.eq.s32.totalorder %s16, 0
      %p78 = por %p76, %p77
      %p79 = scmp.ne.s32.totalorder %s71, %s73
      %p80 = scmp.eq.s32.totalorder %s21, 1
      %p81 = por %p79, %p80
      %p82 = scmp.ne.s32.totalorder %s73, %s74
      %p83 = scmp.eq.s32.totalorder %s21, 0
      %p84 = por %p82, %p83
      %p85 = scmp.ne.s32.totalorder %s73, %s74
      %p86 = scmp.eq.s32.totalorder %s22, 1
      %p87 = por %p85, %p86
      %p89 = scmp.ne.s32.totalorder %s74, %s88
      %p90 = scmp.eq.s32.totalorder %s22, 0
      %p91 = por %p89, %p90
      %s92 = ssub.s32 %s16, %s23
      %p93 = scmp.eq.s32.totalorder %s92, 0
      %s95 = sadd.s32 %s94, 1
      %s96 = scalar_select %p93, %s94, %s95
      %p99 = pneg %p93
      %p100 = scmp.eq.s32.totalorder %s16, 1
      %p101 = por %p99, %p100
      %p102 = scmp.ne.s32.totalorder %s94, %s97
      %p103 = scmp.eq.s32.totalorder %s16, 0
      %p104 = por %p102, %p103
      %p105 = scmp.ne.s32.totalorder %s94, %s97
      %p106 = scmp.eq.s32.totalorder %s21, 1
      %p107 = por %p105, %p106
      %p108 = scmp.ne.s32.totalorder %s97, %s98
      %p109 = scmp.eq.s32.totalorder %s21, 0
      %p110 = por %p108, %p109
      %p111 = scmp.ne.s32.totalorder %s97, %s98
      %p112 = scmp.eq.s32.totalorder %s22, 1
      %p113 = por %p111, %p112
      %p115 = scmp.ne.s32.totalorder %s98, %s114
      %p116 = scmp.eq.s32.totalorder %s22, 0
      %p117 = por %p115, %p116
      %p118 = scmp.le.s32.totalorder 1, %s16
      %p119 = scmp.lt.s32.totalorder %s16, 3
      %p120 = pnand %p118, %p119
      %p121 = pneg %p120
      // Predicated region
      $region9: #{tpu_custom_call.1} parent=5 // pred_check
        _
      $region10: #{tpu_custom_call.1} parent=5 // pred_check_branch
        %123 = sbr.rel (%p120) target = $region12
      $region11: #{tpu_custom_call.1} parent=5 // pred_region
        %s124 = ssub.s32 %s16, 1
        // Predicated region
        $region13: #{tpu_custom_call.1} parent=11 // pred_check
          %p125 = pneg %p63
        $region14: #{tpu_custom_call.1} parent=11 // pred_check_branch
          %127 = sbr.rel (%p125) target = $region16
        $region15: #{tpu_custom_call.1} parent=11 // pred_region
          %129 = vsyncadd [#allocation6], 0
          %s130 = sshll.u32 %s1, 4
          %s131 = int_to_ptr.hbm [resolvable:$true] %s130
          %s132 = sshll.u32 [#allocation5], 4
          %s133 = int_to_ptr.vmem [resolvable:$true] %s132
          %138 = dma.hbm_to_vmem [thread:$0]  %s131, 256, %s133, [#allocation6], 128, 128, 8
        $region16: #{tpu_custom_call.1} parent=11 // pred_fallthru
          _
        // Predicated region
        $region17: #{tpu_custom_call.1} parent=11 // pred_check
          %p139 = pneg %p84
        $region18: #{tpu_custom_call.1} parent=11 // pred_check_branch
          %141 = sbr.rel (%p139) target = $region20
        $region19: #{tpu_custom_call.1} parent=11 // pred_region
          _
        $region20: #{tpu_custom_call.1} parent=11 // pred_fallthru
          _
      $region12: #{tpu_custom_call.1} parent=5 // pred_fallthru
        _
      %p142 = scmp.lt.s32.totalorder %s16, 2
      // Predicated region
      $region21: #{tpu_custom_call.1} parent=5 // pred_check
        %p143 = pneg %p142
      $region22: #{tpu_custom_call.1} parent=5 // pred_check_branch
        %145 = sbr.rel (%p143) target = $region24
      $region23: #{tpu_custom_call.1} parent=5 // pred_region
        // Predicated region
        $region25: #{tpu_custom_call.1} parent=23 // pred_check
          %p146 = pneg %p36
        $region26: #{tpu_custom_call.1} parent=23 // pred_check_branch
          %148 = sbr.rel (%p146) target = $region28
        $region27: #{tpu_custom_call.1} parent=23 // pred_region
          %s149 = sand.u32 %s26, 1
          %s150 = scalar_lea.sflag [#allocation3], %s149
          %s151 = sand.u32 %s26, 1
          %s152 = smul.addr %s151, 8
          %s153 = scalar_lea.vmem [#allocation2], %s152
          %155 = vsyncadd %s150, 0
          %s156 = smul.addr %s16, 8
          %s157 = scalar_lea.hbm %s0, %s156
          %s159 = sshll.u32 %s157, 4
          %s160 = int_to_ptr.hbm [resolvable:$true] %s159
          %s161 = sshll.u32 %s153, 4
          %s162 = int_to_ptr.vmem [resolvable:$true] %s161
          %164 = dma.hbm_to_vmem [thread:$0]  %s160, 128, %s162, %s150
        $region28: #{tpu_custom_call.1} parent=23 // pred_fallthru
          _
      $region24: #{tpu_custom_call.1} parent=5 // pred_fallthru
        _
      %p165 = scmp.le.s32.totalorder 1, %s16
      %p166 = scmp.lt.s32.totalorder %s16, 3
      %p167 = pnand %p165, %p166
      %p168 = pneg %p167
      // Predicated region
      $region29: #{tpu_custom_call.1} parent=5 // pred_check
        _
      $region30: #{tpu_custom_call.1} parent=5 // pred_check_branch
        %170 = sbr.rel (%p167) target = $region32
      $region31: #{tpu_custom_call.1} parent=5 // pred_region
        %s171 = ssub.s32 %s16, 1
        %s172 = sand.u32 %s29, 1
        %s173 = scalar_lea.sflag [#allocation3], %s172
        %s174 = sand.u32 %s29, 1
        %s175 = smul.addr %s174, 8
        %s176 = scalar_lea.vmem [#allocation2], %s175
        // Predicated region
        $region33: #{tpu_custom_call.1} parent=31 // pred_check
          %p177 = pneg %p42
        $region34: #{tpu_custom_call.1} parent=31 // pred_check_branch
          %179 = sbr.rel (%p177) target = $region36
        $region35: #{tpu_custom_call.1} parent=31 // pred_region
          %181 = dma.done %s173, 128
        $region36: #{tpu_custom_call.1} parent=31 // pred_fallthru
          _
        // Predicated region
        $region37: #{tpu_custom_call.1} parent=31 // pred_check
          %p182 = pneg %p63
        $region38: #{tpu_custom_call.1} parent=31 // pred_check_branch
          %184 = sbr.rel (%p182) target = $region40
        $region39: #{tpu_custom_call.1} parent=31 // pred_region
          %186 = dma.done [#allocation6], 256
        $region40: #{tpu_custom_call.1} parent=31 // pred_fallthru
          _
        %s187 = sand.u32 %s29, 1
        %s188 = scalar_lea.sflag [#allocation3], %s187
        %s189 = sand.u32 %s29, 1
        %s190 = smul.addr %s189, 8
        %s191 = scalar_lea.vmem [#allocation2], %s190
        %p192 = pneg %p42
        %p193 = pneg %p39
        %p194 = pneg %p63
        %p195 = pneg %p60
        %p196 = pneg %p84
        %p197 = pneg %p81
        %p198 = pneg %p110
        %p199 = pneg %p107
        %s200 = sand.u32 %s97, 1
        %s201 = scalar_lea.sflag [#allocation4], %s200
        %s202 = sand.u32 %s97, 1
        %s203 = smul.addr %s202, 8
        %s204 = scalar_lea.vmem [#allocation7], %s203
        %v205 = vld [vmem:[%s176] sm:$0xff]
        %v206 = vld [vmem:[#allocation5] sm:$0xff]
        %v207 = vld [vmem:[#allocation5 + $0x8] sm:$0xff]
        %v208 = vld [vmem:[%s2] sm:$0x1]
        %v210 = vperm.slane %v208, 0
        %vm212 = vcmask 130048
        %v214 = vsel %vm212, %v205, 0
        %216 = vmatpush.msra.mxu0 0.0
        %217 = vmatpush.msra.mxu0 0.0
        %218 = vmatpush.msra.mxu0 0.0
        %219 = vmatpush.msra.mxu0 0.0
        %220 = vmatpush.msra.mxu0 0.0
        %221 = vmatpush.msra.mxu0 0.0
        %222 = vmatpush.msra.mxu0 0.0
        %223 = vmatpush.msra.mxu0 0.0
        %224 = vmatpush.msra.mxu0 0.0
        %225 = vmatpush.msra.mxu0 0.0
        %226 = vmatpush.msra.mxu0 0.0
        %227 = vmatpush.msra.mxu0 0.0
        %228 = vmatpush.msra.mxu0 0.0
        %229 = vmatpush.msra.mxu0 0.0
        %230 = vmatpush.msra.mxu0 %v207
        %231 = vmatpush.msra.mxu0 %v206
        %232 = vmatmul.f32.gmra.mxu0 %v214
        %v233 = vpop.f32.mrf.mxu0
        %v234 = vadd.f32 %v210, %v233
        %235 = vdwg.mxu0
        %236 = vst [vmem:[%s204] sm:$0xff] %v234
        %s237 = sand.u32 %s97, 1
        %s238 = scalar_lea.sflag [#allocation4], %s237
        %s239 = sand.u32 %s97, 1
        %s240 = smul.addr %s239, 8
        %s241 = scalar_lea.vmem [#allocation7], %s240
        // Predicated region
        $region41: #{tpu_custom_call.1} parent=31 // pred_check
          %p242 = pneg %p107
        $region42: #{tpu_custom_call.1} parent=31 // pred_check_branch
          %244 = sbr.rel (%p242) target = $region44
        $region43: #{tpu_custom_call.1} parent=31 // pred_region
          %246 = vsyncadd %s238, 0
          %s247 = smul.addr %s21, 8
          %s248 = scalar_lea.hbm %s3, %s247
          %s250 = sshll.u32 %s241, 4
          %s251 = int_to_ptr.vmem [resolvable:$true] %s250
          %s252 = sshll.u32 %s248, 4
          %s253 = int_to_ptr.hbm [resolvable:$true] %s252
          %255 = dma.vmem_to_hbm [thread:$0]  %s251, 128, %s253, %s238
        $region44: #{tpu_custom_call.1} parent=31 // pred_fallthru
          _
      $region32: #{tpu_custom_call.1} parent=5 // pred_fallthru
        _
      %p256 = scmp.le.s32.totalorder 2, %s16
      // Predicated region
      $region45: #{tpu_custom_call.1} parent=5 // pred_check
        %p257 = pneg %p256
      $region46: #{tpu_custom_call.1} parent=5 // pred_check_branch
        %259 = sbr.rel (%p257) target = $region48
      $region47: #{tpu_custom_call.1} parent=5 // pred_region
        %s260 = ssub.s32 %s16, 2
        // Predicated region
        $region49: #{tpu_custom_call.1} parent=47 // pred_check
          %p261 = pneg %p113
        $region50: #{tpu_custom_call.1} parent=47 // pred_check_branch
          %263 = sbr.rel (%p261) target = $region52
        $region51: #{tpu_custom_call.1} parent=47 // pred_region
          %s264 = sand.u32 %s98, 1
          %s265 = scalar_lea.sflag [#allocation4], %s264
          %s266 = sand.u32 %s98, 1
          %s267 = smul.addr %s266, 8
          %s268 = scalar_lea.vmem [#allocation7], %s267
          %270 = dma.done %s265, 128
        $region52: #{tpu_custom_call.1} parent=47 // pred_fallthru
          _
      $region48: #{tpu_custom_call.1} parent=5 // pred_fallthru
        _
    $region6: #{tpu_custom_call.1} parent=1 // loop_footer
      %s20 = sadd.s32 1, %s16
    $region7: #{tpu_custom_call.1} parent=1 // loop_footer_branch
      %15 = sbr.rel target = $region3
    $region8: #{tpu_custom_call.1} parent=1 // loop_exit
      _
    %271 = vsyncpa [#allocation3], 1
    %s272 = scalar_lea.sflag [#allocation3], 1
    %273 = vsyncpa %s272, 1
    %274 = vsyncpa [#allocation6], 1
    %275 = vsyncpa [#allocation4], 1
    %s276 = scalar_lea.sflag [#allocation4], 1
    %277 = vsyncpa %s276, 1

</llo_original>
